<compile_context>
chip_gen: v7x
topology: tpu7x:2x2x1
jax: 0.10.0
libtpu: 0.0.40
codegen_flags: <defaults>
</compile_context>

<pallas_src>
import jax
import jax.numpy as jnp
import numpy as np
from jax.experimental import pallas as pl
from jax.experimental.pallas import tpu as pltpu


# ------------------------------- kernels -------------------------------------


def _channel_att_kernel(x_ref, w1_ref, b1_ref, w2_ref, b2_ref, o_ref):
    # x_ref : (1, TH, W, C1)
    # w1_ref: (C1, Cmid), b1_ref: (1, Cmid)
    # w2_ref: (Cmid, C1), b2_ref: (1, C1)
    # o_ref : (1, TH, W, C1)   = x * MLP(x)
    _, th, w, c = x_ref.shape
    xt = x_ref[...].reshape(th * w, c)
    h = jnp.dot(xt, w1_ref[...], preferred_element_type=jnp.float32) + b1_ref[...]
    h = jnp.maximum(h, 0.0)
    att = jnp.dot(h, w2_ref[...], preferred_element_type=jnp.float32) + b2_ref[...]
    y = xt.astype(jnp.float32) * att
    o_ref[...] = y.reshape(1, th, w, c).astype(o_ref.dtype)


def _spatial_att_kernel(xpad_ref, w1_ref, b1_ref, w2_ref, b2_ref, o_ref, mid_ref):
    # xpad_ref: (1, H+6, W+6, C1)  x_mod zero-padded by 3 (first 'same' 7x7 conv)
    # w1_ref  : (7, 7, C1, Cm)     BN1-folded block-diagonal grouped-conv weights
    # b1_ref  : (1, Cm)
    # w2_ref  : (7, 7, Cm, C2)     BN2-folded weights, output channels pre-shuffled
    # b2_ref  : (1, C2)
    # o_ref   : (1, H, W, C2)
    # mid_ref : VMEM scratch (H+6, W+6, Cm) holding the zero-padded ReLU(BN1(conv1)) intermediate
    _, hh, ww, c2 = o_ref.shape
    c1 = xpad_ref.shape[3]
    cm = w1_ref.shape[3]

    # conv1 (7x7, stride 1, pad 3) as 49 shifted channel matmuls, f32 accumulation.
    acc1 = jnp.zeros((hh * ww, cm), jnp.float32)
    for dy in range(7):
        for dx in range(7):
            patch = xpad_ref[0, dy:dy + hh, dx:dx + ww, :].reshape(hh * ww, c1)
            acc1 = acc1 + jnp.dot(patch, w1_ref[dy, dx],
                                  preferred_element_type=jnp.float32)
    mid = jnp.maximum(acc1 + b1_ref[...], 0.0)          # folded BN1 bias + ReLU

    # zero-pad the intermediate by 3 for the second 'same' conv (matches torch zero padding).
    mid_ref[...] = jnp.zeros_like(mid_ref)
    mid_ref[3:3 + hh, 3:3 + ww, :] = mid.reshape(hh, ww, cm)

    # conv2 (7x7, pad 3); channel shuffle is already folded into w2/b2.
    acc2 = jnp.zeros((hh * ww, c2), jnp.float32)
    for dy in range(7):
        for dx in range(7):
            patch = mid_ref[dy:dy + hh, dx:dx + ww, :].reshape(hh * ww, cm)
            acc2 = acc2 + jnp.dot(patch, w2_ref[dy, dx],
                                  preferred_element_type=jnp.float32)
    gate = jax.nn.sigmoid(acc2 + b2_ref[...])

    # out = x_mod * spatial_gate
    x_mod = xpad_ref[0, 3:3 + hh, 3:3 + ww, :].reshape(hh * ww, c1).astype(jnp.float32)
    o_ref[...] = (x_mod * gate).reshape(1, hh, ww, c2).astype(o_ref.dtype)


# ------------------------------- wrapper --------------------------------------


def _nbytes(shape, dtype=jnp.float32):
    return int(np.prod(shape)) * jnp.dtype(dtype).itemsize


def _vmem_limit(nbytes):
    # double-buffered blocks + weights + scratch with headroom, clamped to a safe range.
    return int(max(4 << 20, min(32 << 20, int(nbytes * 1.25))))


def _group_conv_to_dense(w, groups):
    """(Cout, Cin/groups, kh, kw) grouped-conv weight -> block-diagonal dense (kh, kw, Cin, Cout)."""
    cout, cin_g, kh, kw = w.shape
    cout_g = cout // groups
    cin = cin_g * groups
    dense = jnp.zeros((kh, kw, cin, cout), w.dtype)
    for g in range(groups):
        blk = jnp.transpose(w[g * cout_g:(g + 1) * cout_g], (2, 3, 1, 0))  # (kh,kw,CinG,CoutG)
        dense = dense.at[:, :, g * cin_g:(g + 1) * cin_g,
                         g * cout_g:(g + 1) * cout_g].set(blk)
    return dense


def gam_attention_forward(x_nchw, params, *, rate=4, group=True, eps=1e-5):
    """GAM_Attention forward. x_nchw: (B, C1, H, W) float32 -> (B, C2, H, W), requires C2 == C1."""
    B, C1, H, W = x_nchw.shape
    groups = rate if group else 1

    # ---- fold parameters (plain JAX, once per call; could be cached) ----
    ca_w1 = jnp.transpose(params["ca_w1"])          # (C1, Cmid)
    ca_b1 = params["ca_b1"].reshape(1, -1)
    ca_w2 = jnp.transpose(params["ca_w2"])          # (Cmid, C1)
    ca_b2 = params["ca_b2"].reshape(1, -1)
    Cmid = ca_w1.shape[1]

    w1 = _group_conv_to_dense(params["sa_w1"], groups)      # (7,7,C1,Cm)
    w2 = _group_conv_to_dense(params["sa_w2"], groups)      # (7,7,Cm,C2)
    s1 = params["bn1_gamma"] / jnp.sqrt(params["bn1_var"] + eps)
    b1 = (params["sa_b1"] - params["bn1_mean"]) * s1 + params["bn1_beta"]
    w1 = w1 * s1[None, None, None, :]
    s2 = params["bn2_gamma"] / jnp.sqrt(params["bn2_var"] + eps)
    b2 = (params["sa_b2"] - params["bn2_mean"]) * s2 + params["bn2_beta"]
    w2 = w2 * s2[None, None, None, :]
    Cm = w1.shape[-1]
    C2 = w2.shape[-1]
    assert C2 == C1, "GAM_Attention requires c2 == c1 for the final elementwise gate"
    assert C2 % 4 == 0

    # fold channel_shuffle(groups=4) into conv2's output-channel order (exact).
    k = np.arange(C2)
    perm = (k % 4) * (C2 // 4) + k // 4
    w2 = w2[..., perm]
    b2 = b2[perm]
    b1 = b1.reshape(1, -1)
    b2 = b2.reshape(1, -1)

    # ---- NCHW -> NHWC once ----
    # TODO(synk): for production, keep the network NHWC end-to-end and drop both transposes.
    x_nhwc = jnp.transpose(x_nchw, (0, 2, 3, 1))

    # ---- kernel A: per-pixel channel-attention MLP + modulation, tiled over (B, H-tiles) ----
    th = 8 if H % 8 == 0 else H
    vmem_a = _vmem_limit(4 * _nbytes((1, th, W, C1)) +
                         _nbytes((C1, Cmid)) + _nbytes((Cmid, C1)) +
                         _nbytes((1, Cmid)) + _nbytes((1, C1)))
    x_mod = pl.pallas_call(
        _channel_att_kernel,
        out_shape=jax.ShapeDtypeStruct((B, H, W, C1), x_nchw.dtype),
        grid_spec=pltpu.PrefetchScalarGridSpec(
            num_scalar_prefetch=0,
            grid=(B, H // th),
            in_specs=[
                pl.BlockSpec((1, th, W, C1), lambda b, t: (b, t, 0, 0)),
                pl.BlockSpec((C1, Cmid), lambda b, t: (0, 0)),
                pl.BlockSpec((1, Cmid), lambda b, t: (0, 0)),
                pl.BlockSpec((Cmid, C1), lambda b, t: (0, 0)),
                pl.BlockSpec((1, C1), lambda b, t: (0, 0)),
            ],
            out_specs=pl.BlockSpec((1, th, W, C1), lambda b, t: (b, t, 0, 0)),
        ),
        compiler_params=pltpu.CompilerParams(
            dimension_semantics=("parallel", "parallel"),
            vmem_limit_bytes=vmem_a),
    )(x_nhwc, ca_w1, ca_b1, ca_w2, ca_b2)

    # ---- kernel B: fused spatial attention (2x grouped 7x7 conv + BN + ReLU + sigmoid +
    #      folded channel shuffle) and the final gating; one image per grid step ----
    # TODO(synk): for large H*W / channel counts, tile this kernel over H with a 3-row halo and
    # pad channels to multiples of 128 (lane-dense, bf16 matmul operands) so double-buffered
    # blocks fit the scoped VMEM limit on v7x/v5e.
    x_pad = jnp.pad(x_mod, ((0, 0), (3, 3), (3, 3), (0, 0)))
    vmem_b = _vmem_limit(
        2 * _nbytes((1, H + 6, W + 6, C1)) + 2 * _nbytes((1, H, W, C2)) +
        _nbytes((7, 7, C1, Cm)) + _nbytes((7, 7, Cm, C2)) +
        _nbytes((H + 6, W + 6, Cm)) + _nbytes((1, Cm)) + _nbytes((1, C2)))
    out_nhwc = pl.pallas_call(
        _spatial_att_kernel,
        out_shape=jax.ShapeDtypeStruct((B, H, W, C2), x_nchw.dtype),
        grid_spec=pltpu.PrefetchScalarGridSpec(
            num_scalar_prefetch=0,
            grid=(B,),
            in_specs=[
                pl.BlockSpec((1, H + 6, W + 6, C1), lambda b: (b, 0, 0, 0)),
                pl.BlockSpec((7, 7, C1, Cm), lambda b: (0, 0, 0, 0)),
                pl.BlockSpec((1, Cm), lambda b: (0, 0)),
                pl.BlockSpec((7, 7, Cm, C2), lambda b: (0, 0, 0, 0)),
                pl.BlockSpec((1, C2), lambda b: (0, 0)),
            ],
            out_specs=pl.BlockSpec((1, H, W, C2), lambda b: (b, 0, 0, 0)),
            scratch_shapes=[pltpu.VMEM((H + 6, W + 6, Cm), jnp.float32)],
        ),
        compiler_params=pltpu.CompilerParams(
            dimension_semantics=("parallel",),
            vmem_limit_bytes=vmem_b),
    )(x_pad, w1, b1, w2, b2)

    return jnp.transpose(out_nhwc, (0, 3, 1, 2))   # back to NCHW


# ------------------------------ reference -------------------------------------


def _channel_shuffle_ref(x, groups):
    b, c, h, w = x.shape
    return x.reshape(b, groups, c // groups, h, w).transpose(0, 2, 1, 3, 4).reshape(b, c, h, w)


def _reference(x, params, *, rate=4, group=True, eps=1e-5):
    groups = rate if group else 1
    B, C1, H, W = x.shape
    # channel attention (per-pixel MLP)
    xp = jnp.transpose(x, (0, 2, 3, 1)).reshape(B, H * W, C1)
    h = jnp.maximum(xp @ params["ca_w1"].T + params["ca_b1"], 0.0)
    att = h @ params["ca_w2"].T + params["ca_b2"]
    att = jnp.transpose(att.reshape(B, H, W, C1), (0, 3, 1, 2))
    x_mod = x * att

    def conv_bn(inp, w, bconv, gamma, beta, mean, var):
        dn = jax.lax.conv_dimension_numbers(inp.shape, w.shape, ("NCHW", "OIHW", "NCHW"))
        y = jax.lax.conv_general_dilated(inp, w, (1, 1), ((3, 3), (3, 3)),
                                         dimension_numbers=dn,
                                         feature_group_count=groups)
        y = y + bconv[None, :, None, None]
        y = (y - mean[None, :, None, None]) / jnp.sqrt(var[None, :, None, None] + eps)
        return y * gamma[None, :, None, None] + beta[None, :, None, None]

    y = conv_bn(x_mod, params["sa_w1"], params["sa_b1"], params["bn1_gamma"],
                params["bn1_beta"], params["bn1_mean"], params["bn1_var"])
    y = jnp.maximum(y, 0.0)
    z = conv_bn(y, params["sa_w2"], params["sa_b2"], params["bn2_gamma"],
                params["bn2_beta"], params["bn2_mean"], params["bn2_var"])
    s = _channel_shuffle_ref(jax.nn.sigmoid(z), 4)
    return x_mod * s


if __name__ == "__main__":
    # GAM_Attention(c1=16, c2=16, group=True, rate=4): c1 must be divisible by 16 when group=True.
    B, C1, C2, H, W = 2, 16, 16, 16, 16
    rate, group = 4, True
    groups = rate if group else 1
    Cmid = C1 // rate        # channel-attention hidden width
    Cm = C1 // rate          # spatial-attention mid channels

    key = jax.random.PRNGKey(0)
    ks = jax.random.split(key, 17)
    params = {
        "ca_w1": jax.random.normal(ks[0], (Cmid, C1), jnp.float32) * 0.2,
        "ca_b1": jax.random.normal(ks[1], (Cmid,), jnp.float32) * 0.1,
        "ca_w2": jax.random.normal(ks[2], (C1, Cmid), jnp.float32) * 0.2,
        "ca_b2": jax.random.normal(ks[3], (C1,), jnp.float32) * 0.1,
        "sa_w1": jax.random.normal(ks[4], (Cm, C1 // groups, 7, 7), jnp.float32) * 0.05,
        "sa_b1": jax.random.normal(ks[5], (Cm,), jnp.float32) * 0.1,
        "bn1_gamma": jax.random.uniform(ks[6], (Cm,), jnp.float32, 0.5, 1.5),
        "bn1_beta": jax.random.normal(ks[7], (Cm,), jnp.float32) * 0.1,
        "bn1_mean": jax.random.normal(ks[8], (Cm,), jnp.float32) * 0.1,
        "bn1_var": jax.random.uniform(ks[9], (Cm,), jnp.float32, 0.5, 1.5),
        "sa_w2": jax.random.normal(ks[10], (C2, Cm // groups, 7, 7), jnp.float32) * 0.05,
        "sa_b2": jax.random.normal(ks[11], (C2,), jnp.float32) * 0.1,
        "bn2_gamma": jax.random.uniform(ks[12], (C2,), jnp.float32, 0.5, 1.5),
        "bn2_beta": jax.random.normal(ks[13], (C2,), jnp.float32) * 0.1,
        "bn2_mean": jax.random.normal(ks[14], (C2,), jnp.float32) * 0.1,
        "bn2_var": jax.random.uniform(ks[15], (C2,), jnp.float32, 0.5, 1.5),
    }
    # TODO(synk): training-mode BatchNorm (batch statistics) is not implemented; inference
    # (running-stats) semantics are folded into the conv weights, matching module.eval().

    x = jax.random.normal(ks[16], (B, C1, H, W), jnp.float32)

    out = gam_attention_forward(x, params, rate=rate, group=group)
    jax.block_until_ready(out)

    ref = _reference(x, params, rate=rate, group=group)
    assert out.shape == (B, C2, H, W)
    np.testing.assert_allclose(np.asarray(out), np.asarray(ref), atol=2e-4, rtol=2e-4)

    print("KERNEL_OK")
</pallas_src>

<mosaic_0001>
module attributes {stable_mosaic.version = 11 : i64} {
  func.func @_channel_att_kernel(%arg0: i32, %arg1: i32, %arg2: memref<1x8x16x16xf32, #tpu.memory_space<vmem>>, %arg3: memref<16x4xf32, #tpu.memory_space<vmem>>, %arg4: memref<1x4xf32, #tpu.memory_space<vmem>>, %arg5: memref<4x16xf32, #tpu.memory_space<vmem>>, %arg6: memref<1x16xf32, #tpu.memory_space<vmem>>, %arg7: memref<1x8x16x16xf32, #tpu.memory_space<vmem>>) attributes {dimension_semantics = [#tpu.dimension_semantics<parallel>, #tpu.dimension_semantics<parallel>], iteration_bounds = array<i64: 2, 2>, scalar_prefetch = 0 : i64, scratch_operands = 0 : i64, tpu.core_type = #tpu.core_type<tc>, window_params = [{transform_indices = @transform_0, window_bounds = array<i64: 1, 8, 16, 16>}, {pipeline_mode = #tpu.pipeline_mode<synchronous>, transform_indices = @transform_1, window_bounds = array<i64: 16, 4>}, {pipeline_mode = #tpu.pipeline_mode<synchronous>, transform_indices = @transform_2, window_bounds = array<i64: 1, 4>}, {pipeline_mode = #tpu.pipeline_mode<synchronous>, transform_indices = @transform_3, window_bounds = array<i64: 4, 16>}, {pipeline_mode = #tpu.pipeline_mode<synchronous>, transform_indices = @transform_4, window_bounds = array<i64: 1, 16>}, {transform_indices = @transform_5, window_bounds = array<i64: 1, 8, 16, 16>}]} {
    %c0 = arith.constant 0 : index
    %c0_0 = arith.constant 0 : index
    %c0_1 = arith.constant 0 : index
    %c0_2 = arith.constant 0 : index
    %0 = vector.load %arg2[%c0, %c0_0, %c0_1, %c0_2] : memref<1x8x16x16xf32, #tpu.memory_space<vmem>>, vector<1x8x16x16xf32>
    %1 = vector.shape_cast %0 : vector<1x8x16x16xf32> to vector<128x16xf32>
    %c0_3 = arith.constant 0 : index
    %c0_4 = arith.constant 0 : index
    %2 = vector.load %arg3[%c0_3, %c0_4] : memref<16x4xf32, #tpu.memory_space<vmem>>, vector<16x4xf32>
    %cst = arith.constant dense<0.000000e+00> : vector<128x4xf32>
    %3 = tpu.matmul %1, %2, %cst {dimension_numbers = #tpu.dot_dimension_numbers<[1], [0], [0], [1], [0, 0, 1, 1], [], []>} : vector<128x16xf32>, vector<16x4xf32>, vector<128x4xf32> -> vector<128x4xf32>
    %c0_5 = arith.constant 0 : index
    %c0_6 = arith.constant 0 : index
    %4 = vector.load %arg4[%c0_5, %c0_6] : memref<1x4xf32, #tpu.memory_space<vmem>>, vector<1x4xf32>
    %5 = vector.broadcast %4 : vector<1x4xf32> to vector<128x4xf32>
    %6 = arith.addf %3, %5 : vector<128x4xf32>
    %cst_7 = arith.constant 0.000000e+00 : f32
    %7 = vector.broadcast %cst_7 : f32 to vector<128x4xf32>
    %8 = arith.maximumf %6, %7 : vector<128x4xf32>
    %c0_8 = arith.constant 0 : index
    %c0_9 = arith.constant 0 : index
    %9 = vector.load %arg5[%c0_8, %c0_9] : memref<4x16xf32, #tpu.memory_space<vmem>>, vector<4x16xf32>
    %cst_10 = arith.constant dense<0.000000e+00> : vector<128x16xf32>
    %10 = tpu.matmul %8, %9, %cst_10 {dimension_numbers = #tpu.dot_dimension_numbers<[1], [0], [0], [1], [0, 0, 1, 1], [], []>} : vector<128x4xf32>, vector<4x16xf32>, vector<128x16xf32> -> vector<128x16xf32>
    %c0_11 = arith.constant 0 : index
    %c0_12 = arith.constant 0 : index
    %11 = vector.load %arg6[%c0_11, %c0_12] : memref<1x16xf32, #tpu.memory_space<vmem>>, vector<1x16xf32>
    %12 = vector.broadcast %11 : vector<1x16xf32> to vector<128x16xf32>
    %13 = arith.addf %10, %12 : vector<128x16xf32>
    %14 = arith.mulf %1, %13 : vector<128x16xf32>
    %15 = vector.shape_cast %14 : vector<128x16xf32> to vector<1x8x16x16xf32>
    %c0_13 = arith.constant 0 : index
    %c0_14 = arith.constant 0 : index
    %c0_15 = arith.constant 0 : index
    %c0_16 = arith.constant 0 : index
    %16 = vector.load %arg7[%c0_13, %c0_14, %c0_15, %c0_16] : memref<1x8x16x16xf32, #tpu.memory_space<vmem>>, vector<1x8x16x16xf32>
    tpu.vector_store %arg7[%c0_13, %c0_14, %c0_15, %c0_16], %15 {strides = array<i32>} : memref<1x8x16x16xf32, #tpu.memory_space<vmem>>, vector<1x8x16x16xf32>,
    return
  }
  func.func @transform_0(%arg0: i32, %arg1: i32) -> (i32, i32, i32, i32) {
    %c0_i32 = arith.constant 0 : i32
    %c0_i32_0 = arith.constant 0 : i32
    %c0_i32_1 = arith.constant 0 : i32
    return %arg0, %arg1, %c0_i32, %c0_i32_0 : i32, i32, i32, i32
  }
  func.func @transform_1(%arg0: i32, %arg1: i32) -> (i32, i32) {
    %c0_i32 = arith.constant 0 : i32
    %c0_i32_0 = arith.constant 0 : i32
    %c0_i32_1 = arith.constant 0 : i32
    return %c0_i32, %c0_i32_0 : i32, i32
  }
  func.func @transform_2(%arg0: i32, %arg1: i32) -> (i32, i32) {
    %c0_i32 = arith.constant 0 : i32
    %c0_i32_0 = arith.constant 0 : i32
    %c0_i32_1 = arith.constant 0 : i32
    return %c0_i32, %c0_i32_0 : i32, i32
  }
  func.func @transform_3(%arg0: i32, %arg1: i32) -> (i32, i32) {
    %c0_i32 = arith.constant 0 : i32
    %c0_i32_0 = arith.constant 0 : i32
    %c0_i32_1 = arith.constant 0 : i32
    return %c0_i32, %c0_i32_0 : i32, i32
  }
  func.func @transform_4(%arg0: i32, %arg1: i32) -> (i32, i32) {
    %c0_i32 = arith.constant 0 : i32
    %c0_i32_0 = arith.constant 0 : i32
    %c0_i32_1 = arith.constant 0 : i32
    return %c0_i32, %c0_i32_0 : i32, i32
  }
  func.func @transform_5(%arg0: i32, %arg1: i32) -> (i32, i32, i32, i32) {
    %c0_i32 = arith.constant 0 : i32
    %c0_i32_0 = arith.constant 0 : i32
    %c0_i32_1 = arith.constant 0 : i32
    return %arg0, %arg1, %c0_i32, %c0_i32_0 : i32, i32, i32, i32
  }
}

</mosaic_0001>

<llo_original>
// kernel: tpu_custom_call.1
$region0: #{tpu_custom_call.1}
  #allocation0 [shape = 'u32[]', space=smem, size = 0x4, offset = 0x4, fixed_abs, tag = 'smem constant byte address 0x4 - core index']
  #allocation1 [shape = 'u32[144,128]{1,0:T(1,128)}', space=vmem, size = 0x12000, scoped, tag = 'internal scratch']
  %s0 = inlined_call_operand.hbm [shape: f32[2,16,16,16], index: 0, kind: input, shape index: {}]
  %s1 = inlined_call_operand.vmem [shape: f32[16,4], index: 1, kind: input, shape index: {}]
  %s2 = inlined_call_operand.vmem [shape: f32[1,4], index: 2, kind: input, shape index: {}]
  %s3 = inlined_call_operand.vmem [shape: f32[4,16], index: 3, kind: input, shape index: {}]
  %s4 = inlined_call_operand.vmem [shape: f32[1,16], index: 4, kind: input, shape index: {}]
  %s5 = inlined_call_operand.hbm [shape: f32[2,16,16,16], index: 5, kind: output, shape index: {}]
  %s6 = sld [smem:[#allocation0]]
  $region57: #{tpu_custom_call.1} parent=0
    _
  %s8 = ssub.s32 1, %s6
  %s9 = scalar_select 0, %s8, %s6
  $region1: #{tpu_custom_call.1} parent=0
    #allocation2 [shape = 'u8[131072]{0}', space=vmem, size = 0x20000, scoped, tag = 'input window, operand 0']
    #allocation3 [shape = 's32[2]{0}', space=sflag, size = 0x8, scoped, tag = 'scoped memory for tpu_custom_call.1']
    #allocation4 [shape = 's32[2]{0}', space=sflag, size = 0x8, scoped, tag = 'scoped memory for tpu_custom_call.1']
    #allocation5 [shape = 'u8[131072]{0}', space=vmem, size = 0x20000, scoped, tag = 'output window, operand 0']
    %10 = vsyncpa [#allocation3], 0
    %s11 = scalar_lea.sflag [#allocation3], 1
    %12 = vsyncpa %s11, 0
    %13 = vsyncpa [#allocation4], 0
    %s14 = scalar_lea.sflag [#allocation4], 1
    %15 = vsyncpa %s14, 0
    loop: start=0, step=1, limit=6
    $region2: #{tpu_custom_call.1} parent=1 // loop_pre_header
      _
    $region3: #{tpu_custom_call.1} parent=1 // loop_header
      %s17 = sphi 0, %s21
      %p18 = scmp.ge.s32.totalorder %s17, 6
      %s24 = sphi 0, %s36
      %s25 = sphi 0, %s32
      %s26 = sphi 0, %s24
      %s27 = sphi 0, %s25
      %s28 = sphi 0, %s26
      %s29 = sphi 0, %s27
      %s41 = sphi 0, %s43
      %s44 = sphi 0, %s41
      %s45 = sphi 0, %s44
      %s61 = sphi 0, %s45
      %s65 = sphi 0, %s65
      %s67 = sphi 0, %s65
      %s68 = sphi 0, %s67
      %s82 = sphi 0, %s68
      %s86 = sphi 0, %s86
      %s88 = sphi 0, %s86
      %s89 = sphi 0, %s88
      %s103 = sphi 0, %s89
      %s107 = sphi 0, %s107
      %s109 = sphi 0, %s107
      %s110 = sphi 0, %s109
      %s124 = sphi 0, %s110
      %s128 = sphi 0, %s128
      %s130 = sphi 0, %s128
      %s131 = sphi 0, %s130
      %s145 = sphi 0, %s131
      %s153 = sphi 0, %s155
      %s156 = sphi 0, %s153
      %s157 = sphi 0, %s156
      %s173 = sphi 0, %s157
    $region4: #{tpu_custom_call.1} parent=1 // loop_header_branch
      %20 = sbr.rel (%p18) target = $region8
    $region5: #{tpu_custom_call.1} parent=1 // loop_body
      %s22 = ssub.s32 %s17, 1
      %s23 = ssub.s32 %s17, 2
      %s30 = sadd.s32 1, %s25
      %p31 = scmp.ge.s32.totalorder %s30, 2
      %s32 = scalar_select %p31, 0, %s30
      %s33 = sadd.s32 1, %s24
      %s34 = scalar_select %p31, %s33, %s24
      %p35 = scmp.ge.s32.totalorder %s34, 2
      %s36 = scalar_select %p35, 0, %s34
      %s37 = ssub.s32 %s24, %s36
      %s38 = ssub.s32 %s25, %s32
      %s39 = sor.u32 %s37, %s38
      %p40 = scmp.eq.s32.totalorder %s39, 0
      %s42 = sadd.s32 %s41, 1
      %s43 = scalar_select %p40, %s41, %s42
      %p46 = pneg %p40
      %p47 = scmp.eq.s32.totalorder %s17, 3
      %p48 = por %p46, %p47
      %p49 = scmp.ne.s32.totalorder %s41, %s44
      %p50 = scmp.eq.s32.totalorder %s17, 0
      %p51 = por %p49, %p50
      %p52 = scmp.ne.s32.totalorder %s41, %s44
      %p53 = scmp.eq.s32.totalorder %s22, 3
      %p54 = por %p52, %p53
      %p55 = scmp.ne.s32.totalorder %s44, %s45
      %p56 = scmp.eq.s32.totalorder %s22, 0
      %p57 = por %p55, %p56
      %p58 = scmp.ne.s32.totalorder %s44, %s45
      %p59 = scmp.eq.s32.totalorder %s23, 3
      %p60 = por %p58, %p59
      %p62 = scmp.ne.s32.totalorder %s45, %s61
      %p63 = scmp.eq.s32.totalorder %s23, 0
      %p64 = por %p62, %p63
      %s66 = sadd.s32 %s65, 1
      %p69 = scmp.eq.s32.totalorder %s17, 3
      %p70 = scmp.ne.s32.totalorder %s65, %s67
      %p71 = scmp.eq.s32.totalorder %s17, 0
      %p72 = por %p70, %p71
      %p73 = scmp.ne.s32.totalorder %s65, %s67
      %p74 = scmp.eq.s32.totalorder %s22, 3
      %p75 = por %p73, %p74
      %p76 = scmp.ne.s32.totalorder %s67, %s68
      %p77 = scmp.eq.s32.totalorder %s22, 0
      %p78 = por %p76, %p77
      %p79 = scmp.ne.s32.totalorder %s67, %s68
      %p80 = scmp.eq.s32.totalorder %s23, 3
      %p81 = por %p79, %p80
      %p83 = scmp.ne.s32.totalorder %s68, %s82
      %p84 = scmp.eq.s32.totalorder %s23, 0
      %p85 = por %p83, %p84
      %s87 = sadd.s32 %s86, 1
      %p90 = scmp.eq.s32.totalorder %s17, 3
      %p91 = scmp.ne.s32.totalorder %s86, %s88
      %p92 = scmp.eq.s32.totalorder %s17, 0
      %p93 = por %p91, %p92
      %p94 = scmp.ne.s32.totalorder %s86, %s88
      %p95 = scmp.eq.s32.totalorder %s22, 3
      %p96 = por %p94, %p95
      %p97 = scmp.ne.s32.totalorder %s88, %s89
      %p98 = scmp.eq.s32.totalorder %s22, 0
      %p99 = por %p97, %p98
      %p100 = scmp.ne.s32.totalorder %s88, %s89
      %p101 = scmp.eq.s32.totalorder %s23, 3
      %p102 = por %p100, %p101
      %p104 = scmp.ne.s32.totalorder %s89, %s103
      %p105 = scmp.eq.s32.totalorder %s23, 0
      %p106 = por %p104, %p105
      %s108 = sadd.s32 %s107, 1
      %p111 = scmp.eq.s32.totalorder %s17, 3
      %p112 = scmp.ne.s32.totalorder %s107, %s109
      %p113 = scmp.eq.s32.totalorder %s17, 0
      %p114 = por %p112, %p113
      %p115 = scmp.ne.s32.totalorder %s107, %s109
      %p116 = scmp.eq.s32.totalorder %s22, 3
      %p117 = por %p115, %p116
      %p118 = scmp.ne.s32.totalorder %s109, %s110
      %p119 = scmp.eq.s32.totalorder %s22, 0
      %p120 = por %p118, %p119
      %p121 = scmp.ne.s32.totalorder %s109, %s110
      %p122 = scmp.eq.s32.totalorder %s23, 3
      %p123 = por %p121, %p122
      %p125 = scmp.ne.s32.totalorder %s110, %s124
      %p126 = scmp.eq.s32.totalorder %s23, 0
      %p127 = por %p125, %p126
      %s129 = sadd.s32 %s128, 1
      %p132 = scmp.eq.s32.totalorder %s17, 3
      %p133 = scmp.ne.s32.totalorder %s128, %s130
      %p134 = scmp.eq.s32.totalorder %s17, 0
      %p135 = por %p133, %p134
      %p136 = scmp.ne.s32.totalorder %s128, %s130
      %p137 = scmp.eq.s32.totalorder %s22, 3
      %p138 = por %p136, %p137
      %p139 = scmp.ne.s32.totalorder %s130, %s131
      %p140 = scmp.eq.s32.totalorder %s22, 0
      %p141 = por %p139, %p140
      %p142 = scmp.ne.s32.totalorder %s130, %s131
      %p143 = scmp.eq.s32.totalorder %s23, 3
      %p144 = por %p142, %p143
      %p146 = scmp.ne.s32.totalorder %s131, %s145
      %p147 = scmp.eq.s32.totalorder %s23, 0
      %p148 = por %p146, %p147
      %s149 = ssub.s32 %s24, %s36
      %s150 = ssub.s32 %s25, %s32
      %s151 = sor.u32 %s149, %s150
      %p152 = scmp.eq.s32.totalorder %s151, 0
      %s154 = sadd.s32 %s153, 1
      %s155 = scalar_select %p152, %s153, %s154
      %p158 = pneg %p152
      %p159 = scmp.eq.s32.totalorder %s17, 3
      %p160 = por %p158, %p159
      %p161 = scmp.ne.s32.totalorder %s153, %s156
      %p162 = scmp.eq.s32.totalorder %s17, 0
      %p163 = por %p161, %p162
      %p164 = scmp.ne.s32.totalorder %s153, %s156
      %p165 = scmp.eq.s32.totalorder %s22, 3
      %p166 = por %p164, %p165
      %p167 = scmp.ne.s32.totalorder %s156, %s157
      %p168 = scmp.eq.s32.totalorder %s22, 0
      %p169 = por %p167, %p168
      %p170 = scmp.ne.s32.totalorder %s156, %s157
      %p171 = scmp.eq.s32.totalorder %s23, 3
      %p172 = por %p170, %p171
      %p174 = scmp.ne.s32.totalorder %s157, %s173
      %p175 = scmp.eq.s32.totalorder %s23, 0
      %p176 = por %p174, %p175
      %p177 = scmp.le.s32.totalorder 1, %s17
      %p178 = scmp.lt.s32.totalorder %s17, 5
      %p179 = pnand %p177, %p178
      %p180 = pneg %p179
      // Predicated region
      $region9: #{tpu_custom_call.1} parent=5 // pred_check
        _
      $region10: #{tpu_custom_call.1} parent=5 // pred_check_branch
        %182 = sbr.rel (%p179) target = $region12
      $region11: #{tpu_custom_call.1} parent=5 // pred_region
        %s183 = ssub.s32 %s17, 1
        // Predicated region
        $region13: #{tpu_custom_call.1} parent=11 // pred_check
          %p184 = pneg %p78
        $region14: #{tpu_custom_call.1} parent=11 // pred_check_branch
          %186 = sbr.rel (%p184) target = $region16
        $region15: #{tpu_custom_call.1} parent=11 // pred_region
          _
        $region16: #{tpu_custom_call.1} parent=11 // pred_fallthru
          _
        // Predicated region
        $region17: #{tpu_custom_call.1} parent=11 // pred_check
          %p187 = pneg %p99
        $region18: #{tpu_custom_call.1} parent=11 // pred_check_branch
          %189 = sbr.rel (%p187) target = $region20
        $region19: #{tpu_custom_call.1} parent=11 // pred_region
          _
        $region20: #{tpu_custom_call.1} parent=11 // pred_fallthru
          _
        // Predicated region
        $region21: #{tpu_custom_call.1} parent=11 // pred_check
          %p190 = pneg %p120
        $region22: #{tpu_custom_call.1} parent=11 // pred_check_branch
          %192 = sbr.rel (%p190) target = $region24
        $region23: #{tpu_custom_call.1} parent=11 // pred_region
          _
        $region24: #{tpu_custom_call.1} parent=11 // pred_fallthru
          _
        // Predicated region
        $region25: #{tpu_custom_call.1} parent=11 // pred_check
          %p193 = pneg %p141
        $region26: #{tpu_custom_call.1} parent=11 // pred_check_branch
          %195 = sbr.rel (%p193) target = $region28
        $region27: #{tpu_custom_call.1} parent=11 // pred_region
          _
        $region28: #{tpu_custom_call.1} parent=11 // pred_fallthru
          _
      $region12: #{tpu_custom_call.1} parent=5 // pred_fallthru
        _
      %p196 = scmp.lt.s32.totalorder %s17, 4
      // Predicated region
      $region29: #{tpu_custom_call.1} parent=5 // pred_check
        %p197 = pneg %p196
      $region30: #{tpu_custom_call.1} parent=5 // pred_check_branch
        %199 = sbr.rel (%p197) target = $region32
      $region31: #{tpu_custom_call.1} parent=5 // pred_region
        // Predicated region
        $region33: #{tpu_custom_call.1} parent=31 // pred_check
          %p200 = pneg %p51
        $region34: #{tpu_custom_call.1} parent=31 // pred_check_branch
          %202 = sbr.rel (%p200) target = $region36
        $region35: #{tpu_custom_call.1} parent=31 // pred_region
          %s203 = sand.u32 %s41, 1
          %s204 = scalar_lea.sflag [#allocation3], %s203
          %s205 = sand.u32 %s41, 1
          %s206 = smul.addr %s205, 128
          %s207 = scalar_lea.vmem [#allocation2], %s206
          %s208 = smul.u32 8, %s25
          %s210 = ssub.s32 2048, 2048
          %211 = vsyncadd %s204, %s210
          %s212 = smul.addr %s208, 2
          %s213 = smul.addr %s24, 32
          %s214 = sadd.s32 %s212, %s213
          %s215 = smul.addr %s214, 128
          %s216 = scalar_lea.hbm %s0, %s215
          %s217 = sshll.u32 %s207, 4
          %s218 = int_to_ptr.vmem [resolvable:$true] %s217
          %223 = dma.hbm_to_vmem [thread:$0]  %s216, 2048, %s218, %s204, 128, 128, 8
        $region36: #{tpu_custom_call.1} parent=31 // pred_fallthru
          _
      $region32: #{tpu_custom_call.1} parent=5 // pred_fallthru
        _
      %p224 = scmp.le.s32.totalorder 1, %s17
      %p225 = scmp.lt.s32.totalorder %s17, 5
      %p226 = pnand %p224, %p225
      %p227 = pneg %p226
      // Predicated region
      $region37: #{tpu_custom_call.1} parent=5 // pred_check
        _
      $region38: #{tpu_custom_call.1} parent=5 // pred_check_branch
        %229 = sbr.rel (%p226) target = $region40
      $region39: #{tpu_custom_call.1} parent=5 // pred_region
        %s230 = ssub.s32 %s17, 1
        %s231 = sand.u32 %s44, 1
        %s232 = scalar_lea.sflag [#allocation3], %s231
        %s233 = sand.u32 %s44, 1
        %s234 = smul.addr %s233, 128
        %s235 = scalar_lea.vmem [#allocation2], %s234
        // Predicated region
        $region41: #{tpu_custom_call.1} parent=39 // pred_check
          %p236 = pneg %p57
        $region42: #{tpu_custom_call.1} parent=39 // pred_check_branch
          %238 = sbr.rel (%p236) target = $region44
        $region43: #{tpu_custom_call.1} parent=39 // pred_region
          %239 = dma.done %s232, 2048
        $region44: #{tpu_custom_call.1} parent=39 // pred_fallthru
          _
        %s240 = sand.u32 %s44, 1
        %s241 = scalar_lea.sflag [#allocation3], %s240
        %s242 = sand.u32 %s44, 1
        %s243 = smul.addr %s242, 128
        %s244 = scalar_lea.vmem [#allocation2], %s243
        %p245 = pneg %p57
        %p246 = pneg %p54
        %p247 = pneg %p78
        %p248 = pneg %p75
        %p249 = pneg %p99
        %p250 = pneg %p96
        %p251 = pneg %p120
        %p252 = pneg %p117
        %p253 = pneg %p141
        %p254 = pneg %p138
        %p255 = pneg %p169
        %p256 = pneg %p166
        %s257 = sand.u32 %s156, 1
        %s258 = scalar_lea.sflag [#allocation4], %s257
        %s259 = sand.u32 %s156, 1
        %s260 = smul.addr %s259, 128
        %s261 = scalar_lea.vmem [#allocation5], %s260
        %s262 = smul.u32 8, %s27
        %s263 = smul.u32 8, %s27
        %v264 = vld [vmem:[%s235] sm:$0xff]
        %v265 = vld [vmem:[%s235 + $0x8] sm:$0xff]
        %v266 = vld [vmem:[%s235 + $0x10] sm:$0xff]
        %v267 = vld [vmem:[%s235 + $0x18] sm:$0xff]
        %v268 = vld [vmem:[%s235 + $0x20] sm:$0xff]
        %v269 = vld [vmem:[%s235 + $0x28] sm:$0xff]
        %v270 = vld [vmem:[%s235 + $0x30] sm:$0xff]
        %v271 = vld [vmem:[%s235 + $0x38] sm:$0xff]
        %v272 = vld [vmem:[%s235 + $0x40] sm:$0xff]
        %v273 = vld [vmem:[%s235 + $0x48] sm:$0xff]
        %v274 = vld [vmem:[%s235 + $0x50] sm:$0xff]
        %v275 = vld [vmem:[%s235 + $0x58] sm:$0xff]
        %v276 = vld [vmem:[%s235 + $0x60] sm:$0xff]
        %v277 = vld [vmem:[%s235 + $0x68] sm:$0xff]
        %v278 = vld [vmem:[%s235 + $0x70] sm:$0xff]
        %v279 = vld [vmem:[%s235 + $0x78] sm:$0xff]
        %v280 = vld [vmem:[%s1] sm:$0xff]
        %v281 = vld [vmem:[%s1 + $0x8] sm:$0xff]
        %v282 = vld [vmem:[%s2] sm:$0x1]
        %v284 = vlaneseq
        %v285 = vshrl.u32 %v284, 7
        %v286 = vsub.s32 0, %v285
        %v287 = vrot.slane %v282, %v286
        %vm289 = vcmask 130048
        %v291 = vsel %vm289, %v264, 0
        %v294 = vsel %vm289, %v265, 0
        %v297 = vsel %vm289, %v266, 0
        %v300 = vsel %vm289, %v267, 0
        %v303 = vsel %vm289, %v268, 0
        %v306 = vsel %vm289, %v269, 0
        %v309 = vsel %vm289, %v270, 0
        %v312 = vsel %vm289, %v271, 0
        %v315 = vsel %vm289, %v272, 0
        %v318 = vsel %vm289, %v273, 0
        %v321 = vsel %vm289, %v274, 0
        %v324 = vsel %vm289, %v275, 0
        %v327 = vsel %vm289, %v276, 0
        %v330 = vsel %vm289, %v277, 0
        %v333 = vsel %vm289, %v278, 0
        %v336 = vsel %vm289, %v279, 0
        %338 = vmatprep.subr.mxu0 0.0
        %339 = vmatpush1.msra.mxu0 %v280
        %340 = vmatprep.subr.mxu0 0.0
        %341 = vmatpush1.msra.mxu0 %v281
        %342 = vmatprep.subr.mxu0 0.0
        %343 = vmatpush1.msra.mxu0 0.0
        %344 = vmatprep.subr.mxu0 0.0
        %345 = vmatpush1.msra.mxu0 0.0
        %346 = vmatprep.subr.mxu0 0.0
        %347 = vmatpush1.msra.mxu0 0.0
        %348 = vmatprep.subr.mxu0 0.0
        %349 = vmatpush1.msra.mxu0 0.0
        %350 = vmatprep.subr.mxu0 0.0
        %351 = vmatpush1.msra.mxu0 0.0
        %352 = vmatprep.subr.mxu0 0.0
        %353 = vmatpush1.msra.mxu0 0.0
        %354 = vmatprep.subr.mxu0 0.0
        %355 = vmatpush1.msra.mxu0 0.0
        %356 = vmatprep.subr.mxu0 0.0
        %357 = vmatpush1.msra.mxu0 0.0
        %358 = vmatprep.subr.mxu0 0.0
        %359 = vmatpush1.msra.mxu0 0.0
        %360 = vmatprep.subr.mxu0 0.0
        %361 = vmatpush1.msra.mxu0 0.0
        %362 = vmatprep.subr.mxu0 0.0
        %363 = vmatpush1.msra.mxu0 0.0
        %364 = vmatprep.subr.mxu0 0.0
        %365 = vmatpush1.msra.mxu0 0.0
        %366 = vmatprep.subr.mxu0 0.0
        %367 = vmatpush1.msra.mxu0 0.0
        %368 = vmatprep.subr.mxu0 0.0
        %369 = vmatpush1.msra.mxu0 0.0
        %370 = vmatprep.subr.mxu0 0.0
        %371 = vmatpush1.msra.mxu0 0.0
        %372 = vmatprep.subr.mxu0 0.0
        %373 = vmatpush1.msra.mxu0 0.0
        %374 = vmatprep.subr.mxu0 0.0
        %375 = vmatpush1.msra.mxu0 0.0
        %376 = vmatprep.subr.mxu0 0.0
        %377 = vmatpush1.msra.mxu0 0.0
        %378 = vmatprep.subr.mxu0 0.0
        %379 = vmatpush1.msra.mxu0 0.0
        %380 = vmatprep.subr.mxu0 0.0
        %381 = vmatpush1.msra.mxu0 0.0
        %382 = vmatprep.subr.mxu0 0.0
        %383 = vmatpush1.msra.mxu0 0.0
        %384 = vmatprep.subr.mxu0 0.0
        %385 = vmatpush1.msra.mxu0 0.0
        %386 = vmatprep.subr.mxu0 0.0
        %387 = vmatpush1.msra.mxu0 0.0
        %388 = vmatprep.subr.mxu0 0.0
        %389 = vmatpush1.msra.mxu0 0.0
        %390 = vmatprep.subr.mxu0 0.0
        %391 = vmatpush1.msra.mxu0 0.0
        %392 = vmatprep.subr.mxu0 0.0
        %393 = vmatpush1.msra.mxu0 0.0
        %394 = vmatprep.subr.mxu0 0.0
        %395 = vmatpush1.msra.mxu0 0.0
        %396 = vmatprep.subr.mxu0 0.0
        %397 = vmatpush1.msra.mxu0 0.0
        %398 = vmatprep.subr.mxu0 0.0
        %399 = vmatpush1.msra.mxu0 0.0
        %400 = vmatprep.subr.mxu0 0.0
        %401 = vmatpush1.msra.mxu0 0.0
        %402 = vmatprep.mubr.f32.mxu0 0.0
        %403 = vmatmul.mubr.f32.gmra.mrb[0].mxu0 %v291
        %v404 = vpop.f32.mrb[0].mxu0
        %v405 = vadd.f32 %v287, %v404
        %v406 = vpop.f32.mrb[0].mxu0
        %407 = vmatprep.mubr.f32.mxu0 0.0
        %408 = vmatmul.mubr.f32.gmra.mrb[0].mxu0 %v294
        %v409 = vpop.f32.mrb[0].mxu0
        %v410 = vadd.f32 %v287, %v409
        %v411 = vpop.f32.mrb[0].mxu0
        %412 = vmatprep.mubr.f32.mxu0 0.0
        %413 = vmatmul.mubr.f32.gmra.mrb[0].mxu0 %v297
        %v414 = vpop.f32.mrb[0].mxu0
        %v415 = vadd.f32 %v287, %v414
        %v416 = vpop.f32.mrb[0].mxu0
        %417 = vmatprep.mubr.f32.mxu0 0.0
        %418 = vmatmul.mubr.f32.gmra.mrb[0].mxu0 %v300
        %v419 = vpop.f32.mrb[0].mxu0
        %v420 = vadd.f32 %v287, %v419
        %v421 = vpop.f32.mrb[0].mxu0
        %422 = vmatprep.mubr.f32.mxu0 0.0
        %423 = vmatmul.mubr.f32.gmra.mrb[0].mxu0 %v303
        %v424 = vpop.f32.mrb[0].mxu0
        %v425 = vadd.f32 %v287, %v424
        %v426 = vpop.f32.mrb[0].mxu0
        %427 = vmatprep.mubr.f32.mxu0 0.0
        %428 = vmatmul.mubr.f32.gmra.mrb[0].mxu0 %v306
        %v429 = vpop.f32.mrb[0].mxu0
        %v430 = vadd.f32 %v287, %v429
        %v431 = vpop.f32.mrb[0].mxu0
        %432 = vmatprep.mubr.f32.mxu0 0.0
        %433 = vmatmul.mubr.f32.gmra.mrb[0].mxu0 %v309
        %v434 = vpop.f32.mrb[0].mxu0
        %v435 = vadd.f32 %v287, %v434
        %v436 = vpop.f32.mrb[0].mxu0
        %437 = vmatprep.mubr.f32.mxu0 0.0
        %438 = vmatmul.mubr.f32.gmra.mrb[0].mxu0 %v312
        %v439 = vpop.f32.mrb[0].mxu0
        %v440 = vadd.f32 %v287, %v439
        %v441 = vpop.f32.mrb[0].mxu0
        %442 = vmatprep.mubr.f32.mxu0 0.0
        %443 = vmatmul.mubr.f32.gmra.mrb[0].mxu0 %v315
        %v444 = vpop.f32.mrb[0].mxu0
        %v445 = vadd.f32 %v287, %v444
        %v446 = vpop.f32.mrb[0].mxu0
        %447 = vmatprep.mubr.f32.mxu0 0.0
        %448 = vmatmul.mubr.f32.gmra.mrb[0].mxu0 %v318
        %v449 = vpop.f32.mrb[0].mxu0
        %v450 = vadd.f32 %v287, %v449
        %v451 = vpop.f32.mrb[0].mxu0
        %452 = vmatprep.mubr.f32.mxu0 0.0
        %453 = vmatmul.mubr.f32.gmra.mrb[0].mxu0 %v321
        %v454 = vpop.f32.mrb[0].mxu0
        %v455 = vadd.f32 %v287, %v454
        %v456 = vpop.f32.mrb[0].mxu0
        %457 = vmatprep.mubr.f32.mxu0 0.0
        %458 = vmatmul.mubr.f32.gmra.mrb[0].mxu0 %v324
        %v459 = vpop.f32.mrb[0].mxu0
        %v460 = vadd.f32 %v287, %v459
        %v461 = vpop.f32.mrb[0].mxu0
        %462 = vmatprep.mubr.f32.mxu0 0.0
        %463 = vmatmul.mubr.f32.gmra.mrb[0].mxu0 %v327
        %v464 = vpop.f32.mrb[0].mxu0
        %v465 = vadd.f32 %v287, %v464
        %v466 = vpop.f32.mrb[0].mxu0
        %467 = vmatprep.mubr.f32.mxu0 0.0
        %468 = vmatmul.mubr.f32.gmra.mrb[0].mxu0 %v330
        %v469 = vpop.f32.mrb[0].mxu0
        %v470 = vadd.f32 %v287, %v469
        %v471 = vpop.f32.mrb[0].mxu0
        %472 = vmatprep.mubr.f32.mxu0 0.0
        %473 = vmatmul.mubr.f32.gmra.mrb[0].mxu0 %v333
        %v474 = vpop.f32.mrb[0].mxu0
        %v475 = vadd.f32 %v287, %v474
        %v476 = vpop.f32.mrb[0].mxu0
        %477 = vmatprep.mubr.f32.mxu0 0.0
        %478 = vmatmul.mubr.f32.gmra.mrb[0].mxu0 %v336
        %v479 = vpop.f32.mrb[0].mxu0
        %v480 = vadd.f32 %v287, %v479
        %v481 = vpop.f32.mrb[0].mxu0
        %482 = vdwg.mxu0
        %v483 = vmax.f32 %v405, 0.0
        %v484 = vmax.f32 %v410, 0.0
        %v485 = vmax.f32 %v415, 0.0
        %v486 = vmax.f32 %v420, 0.0
        %v487 = vmax.f32 %v425, 0.0
        %v488 = vmax.f32 %v430, 0.0
        %v489 = vmax.f32 %v435, 0.0
        %v490 = vmax.f32 %v440, 0.0
        %v491 = vmax.f32 %v445, 0.0
        %v492 = vmax.f32 %v450, 0.0
        %v493 = vmax.f32 %v455, 0.0
        %v494 = vmax.f32 %v460, 0.0
        %v495 = vmax.f32 %v465, 0.0
        %v496 = vmax.f32 %v470, 0.0
        %v497 = vmax.f32 %v475, 0.0
        %v498 = vmax.f32 %v480, 0.0
        %v499 = vld [vmem:[%s3] sm:$0xf]
        %v500 = vld [vmem:[%s4] sm:$0x1]
        %v502 = vlaneseq
        %v503 = vshrl.u32 %v502, 7
        %v504 = vsub.s32 0, %v503
        %v505 = vrot.slane %v500, %v504
        %vm507 = vcmask 31744
        %v509 = vsel %vm507, %v483, 0
        %v512 = vsel %vm507, %v484, 0
        %v515 = vsel %vm507, %v485, 0
        %v518 = vsel %vm507, %v486, 0
        %v521 = vsel %vm507, %v487, 0
        %v524 = vsel %vm507, %v488, 0
        %v527 = vsel %vm507, %v489, 0
        %v530 = vsel %vm507, %v490, 0
        %v533 = vsel %vm507, %v491, 0
        %v536 = vsel %vm507, %v492, 0
        %v539 = vsel %vm507, %v493, 0
        %v542 = vsel %vm507, %v494, 0
        %v545 = vsel %vm507, %v495, 0
        %v548 = vsel %vm507, %v496, 0
        %v551 = vsel %vm507, %v497, 0
        %v554 = vsel %vm507, %v498, 0
        %vm556 = vcmask 1043456
        %v558 = vsel %vm556, %v499, 0
        %560 = vmatprep.subr.mxu0 0.0
        %561 = vmatpush1.msra.mxu0 %v558
        %562 = vmatprep.subr.mxu0 0.0
        %563 = vmatpush1.msra.mxu0 0.0
        %564 = vmatprep.subr.mxu0 0.0
        %565 = vmatpush1.msra.mxu0 0.0
        %566 = vmatprep.subr.mxu0 0.0
        %567 = vmatpush1.msra.mxu0 0.0
        %568 = vmatprep.subr.mxu0 0.0
        %569 = vmatpush1.msra.mxu0 0.0
        %570 = vmatprep.subr.mxu0 0.0
        %571 = vmatpush1.msra.mxu0 0.0
        %572 = vmatprep.subr.mxu0 0.0
        %573 = vmatpush1.msra.mxu0 0.0
        %574 = vmatprep.subr.mxu0 0.0
        %575 = vmatpush1.msra.mxu0 0.0
        %576 = vmatprep.subr.mxu0 0.0
        %577 = vmatpush1.msra.mxu0 0.0
        %578 = vmatprep.subr.mxu0 0.0
        %579 = vmatpush1.msra.mxu0 0.0
        %580 = vmatprep.subr.mxu0 0.0
        %581 = vmatpush1.msra.mxu0 0.0
        %582 = vmatprep.subr.mxu0 0.0
        %583 = vmatpush1.msra.mxu0 0.0
        %584 = vmatprep.subr.mxu0 0.0
        %585 = vmatpush1.msra.mxu0 0.0
        %586 = vmatprep.subr.mxu0 0.0
        %587 = vmatpush1.msra.mxu0 0.0
        %588 = vmatprep.subr.mxu0 0.0
        %589 = vmatpush1.msra.mxu0 0.0
        %590 = vmatprep.subr.mxu0 0.0
        %591 = vmatpush1.msra.mxu0 0.0
        %592 = vmatprep.subr.mxu0 0.0
        %593 = vmatpush1.msra.mxu0 0.0
        %594 = vmatprep.subr.mxu0 0.0
        %595 = vmatpush1.msra.mxu0 0.0
        %596 = vmatprep.subr.mxu0 0.0
        %597 = vmatpush1.msra.mxu0 0.0
        %598 = vmatprep.subr.mxu0 0.0
        %599 = vmatpush1.msra.mxu0 0.0
        %600 = vmatprep.subr.mxu0 0.0
        %601 = vmatpush1.msra.mxu0 0.0
        %602 = vmatprep.subr.mxu0 0.0
        %603 = vmatpush1.msra.mxu0 0.0
        %604 = vmatprep.subr.mxu0 0.0
        %605 = vmatpush1.msra.mxu0 0.0
        %606 = vmatprep.subr.mxu0 0.0
        %607 = vmatpush1.msra.mxu0 0.0
        %608 = vmatprep.subr.mxu0 0.0
        %609 = vmatpush1.msra.mxu0 0.0
        %610 = vmatprep.subr.mxu0 0.0
        %611 = vmatpush1.msra.mxu0 0.0
        %612 = vmatprep.subr.mxu0 0.0
        %613 = vmatpush1.msra.mxu0 0.0
        %614 = vmatprep.subr.mxu0 0.0
        %615 = vmatpush1.msra.mxu0 0.0
        %616 = vmatprep.subr.mxu0 0.0
        %617 = vmatpush1.msra.mxu0 0.0
        %618 = vmatprep.subr.mxu0 0.0
        %619 = vmatpush1.msra.mxu0 0.0
        %620 = vmatprep.subr.mxu0 0.0
        %621 = vmatpush1.msra.mxu0 0.0
        %622 = vmatprep.subr.mxu0 0.0
        %623 = vmatpush1.msra.mxu0 0.0
        %624 = vmatprep.mubr.f32.mxu0 0.0
        %625 = vmatmul.mubr.f32.gmra.mrb[0].mxu0 %v509
        %v626 = vpop.f32.mrb[0].mxu0
        %v627 = vadd.f32 %v505, %v626
        %v628 = vpop.f32.mrb[0].mxu0
        %629 = vmatprep.mubr.f32.mxu0 0.0
        %630 = vmatmul.mubr.f32.gmra.mrb[0].mxu0 %v512
        %v631 = vpop.f32.mrb[0].mxu0
        %v632 = vadd.f32 %v505, %v631
        %v633 = vpop.f32.mrb[0].mxu0
        %634 = vmatprep.mubr.f32.mxu0 0.0
        %635 = vmatmul.mubr.f32.gmra.mrb[0].mxu0 %v515
        %v636 = vpop.f32.mrb[0].mxu0
        %v637 = vadd.f32 %v505, %v636
        %v638 = vpop.f32.mrb[0].mxu0
        %639 = vmatprep.mubr.f32.mxu0 0.0
        %640 = vmatmul.mubr.f32.gmra.mrb[0].mxu0 %v518
        %v641 = vpop.f32.mrb[0].mxu0
        %v642 = vadd.f32 %v505, %v641
        %v643 = vpop.f32.mrb[0].mxu0
        %644 = vmatprep.mubr.f32.mxu0 0.0
        %645 = vmatmul.mubr.f32.gmra.mrb[0].mxu0 %v521
        %v646 = vpop.f32.mrb[0].mxu0
        %v647 = vadd.f32 %v505, %v646
        %v648 = vpop.f32.mrb[0].mxu0
        %649 = vmatprep.mubr.f32.mxu0 0.0
        %650 = vmatmul.mubr.f32.gmra.mrb[0].mxu0 %v524
        %v651 = vpop.f32.mrb[0].mxu0
        %v652 = vadd.f32 %v505, %v651
        %v653 = vpop.f32.mrb[0].mxu0
        %654 = vmatprep.mubr.f32.mxu0 0.0
        %655 = vmatmul.mubr.f32.gmra.mrb[0].mxu0 %v527
        %v656 = vpop.f32.mrb[0].mxu0
        %v657 = vadd.f32 %v505, %v656
        %v658 = vpop.f32.mrb[0].mxu0
        %659 = vmatprep.mubr.f32.mxu0 0.0
        %660 = vmatmul.mubr.f32.gmra.mrb[0].mxu0 %v530
        %v661 = vpop.f32.mrb[0].mxu0
        %v662 = vadd.f32 %v505, %v661
        %v663 = vpop.f32.mrb[0].mxu0
        %664 = vmatprep.mubr.f32.mxu0 0.0
        %665 = vmatmul.mubr.f32.gmra.mrb[0].mxu0 %v533
        %v666 = vpop.f32.mrb[0].mxu0
        %v667 = vadd.f32 %v505, %v666
        %v668 = vpop.f32.mrb[0].mxu0
        %669 = vmatprep.mubr.f32.mxu0 0.0
        %670 = vmatmul.mubr.f32.gmra.mrb[0].mxu0 %v536
        %v671 = vpop.f32.mrb[0].mxu0
        %v672 = vadd.f32 %v505, %v671
        %v673 = vpop.f32.mrb[0].mxu0
        %674 = vmatprep.mubr.f32.mxu0 0.0
        %675 = vmatmul.mubr.f32.gmra.mrb[0].mxu0 %v539
        %v676 = vpop.f32.mrb[0].mxu0
        %v677 = vadd.f32 %v505, %v676
        %v678 = vpop.f32.mrb[0].mxu0
        %679 = vmatprep.mubr.f32.mxu0 0.0
        %680 = vmatmul.mubr.f32.gmra.mrb[0].mxu0 %v542
        %v681 = vpop.f32.mrb[0].mxu0
        %v682 = vadd.f32 %v505, %v681
        %v683 = vpop.f32.mrb[0].mxu0
        %684 = vmatprep.mubr.f32.mxu0 0.0
        %685 = vmatmul.mubr.f32.gmra.mrb[0].mxu0 %v545
        %v686 = vpop.f32.mrb[0].mxu0
        %v687 = vadd.f32 %v505, %v686
        %v688 = vpop.f32.mrb[0].mxu0
        %689 = vmatprep.mubr.f32.mxu0 0.0
        %690 = vmatmul.mubr.f32.gmra.mrb[0].mxu0 %v548
        %v691 = vpop.f32.mrb[0].mxu0
        %v692 = vadd.f32 %v505, %v691
        %v693 = vpop.f32.mrb[0].mxu0
        %694 = vmatprep.mubr.f32.mxu0 0.0
        %695 = vmatmul.mubr.f32.gmra.mrb[0].mxu0 %v551
        %v696 = vpop.f32.mrb[0].mxu0
        %v697 = vadd.f32 %v505, %v696
        %v698 = vpop.f32.mrb[0].mxu0
        %699 = vmatprep.mubr.f32.mxu0 0.0
        %700 = vmatmul.mubr.f32.gmra.mrb[0].mxu0 %v554
        %v701 = vpop.f32.mrb[0].mxu0
        %v702 = vadd.f32 %v505, %v701
        %v703 = vpop.f32.mrb[0].mxu0
        %704 = vdwg.mxu0
        %v705 = vmul.f32 %v264, %v627
        %v706 = vmul.f32 %v265, %v632
        %v707 = vmul.f32 %v266, %v637
        %v708 = vmul.f32 %v267, %v642
        %v709 = vmul.f32 %v268, %v647
        %v710 = vmul.f32 %v269, %v652
        %v711 = vmul.f32 %v270, %v657
        %v712 = vmul.f32 %v271, %v662
        %v713 = vmul.f32 %v272, %v667
        %v714 = vmul.f32 %v273, %v672
        %v715 = vmul.f32 %v274, %v677
        %v716 = vmul.f32 %v275, %v682
        %v717 = vmul.f32 %v276, %v687
        %v718 = vmul.f32 %v277, %v692
        %v719 = vmul.f32 %v278, %v697
        %v720 = vmul.f32 %v279, %v702
        %721 = vst.msk [vmem:[%s261] sm:$0xff] %vm289, %v705
        %722 = vst.msk [vmem:[%s261 + $0x8] sm:$0xff] %vm289, %v706
        %723 = vst.msk [vmem:[%s261 + $0x10] sm:$0xff] %vm289, %v707
        %724 = vst.msk [vmem:[%s261 + $0x18] sm:$0xff] %vm289, %v708
        %725 = vst.msk [vmem:[%s261 + $0x20] sm:$0xff] %vm289, %v709
        %726 = vst.msk [vmem:[%s261 + $0x28] sm:$0xff] %vm289, %v710
        %727 = vst.msk [vmem:[%s261 + $0x30] sm:$0xff] %vm289, %v711
        %728 = vst.msk [vmem:[%s261 + $0x38] sm:$0xff] %vm289, %v712
        %729 = vst.msk [vmem:[%s261 + $0x40] sm:$0xff] %vm289, %v713
        %730 = vst.msk [vmem:[%s261 + $0x48] sm:$0xff] %vm289, %v714
        %731 = vst.msk [vmem:[%s261 + $0x50] sm:$0xff] %vm289, %v715
        %732 = vst.msk [vmem:[%s261 + $0x58] sm:$0xff] %vm289, %v716
        %733 = vst.msk [vmem:[%s261 + $0x60] sm:$0xff] %vm289, %v717
        %734 = vst.msk [vmem:[%s261 + $0x68] sm:$0xff] %vm289, %v718
        %735 = vst.msk [vmem:[%s261 + $0x70] sm:$0xff] %vm289, %v719
        %736 = vst.msk [vmem:[%s261 + $0x78] sm:$0xff] %vm289, %v720
        %s737 = sand.u32 %s156, 1
        %s738 = scalar_lea.sflag [#allocation4], %s737
        %s739 = sand.u32 %s156, 1
        %s740 = smul.addr %s739, 128
        %s741 = scalar_lea.vmem [#allocation5], %s740
        // Predicated region
        $region45: #{tpu_custom_call.1} parent=39 // pred_check
          %p742 = pneg %p166
        $region46: #{tpu_custom_call.1} parent=39 // pred_check_branch
          %744 = sbr.rel (%p742) target = $region48
        $region47: #{tpu_custom_call.1} parent=39 // pred_region
          %s745 = smul.u32 8, %s27
          %s747 = ssub.s32 2048, 2048
          %748 = vsyncadd %s738, %s747
          %s749 = smul.addr %s745, 2
          %s750 = smul.addr %s26, 32
          %s751 = sadd.s32 %s749, %s750
          %s752 = smul.addr %s751, 128
          %s753 = scalar_lea.hbm %s5, %s752
          %s754 = sshll.u32 %s741, 4
          %s755 = int_to_ptr.vmem [resolvable:$true] %s754
          %760 = dma.vmem_to_hbm [thread:$0]  %s755, 2048, %s753, %s738, 128, 128, 8
        $region48: #{tpu_custom_call.1} parent=39 // pred_fallthru
          _
      $region40: #{tpu_custom_call.1} parent=5 // pred_fallthru
        _
      %p761 = scmp.le.s32.totalorder 2, %s17
      // Predicated region
      $region49: #{tpu_custom_call.1} parent=5 // pred_check
        %p762 = pneg %p761
      $region50: #{tpu_custom_call.1} parent=5 // pred_check_branch
        %764 = sbr.rel (%p762) target = $region52
      $region51: #{tpu_custom_call.1} parent=5 // pred_region
        %s765 = ssub.s32 %s17, 2
        // Predicated region
        $region53: #{tpu_custom_call.1} parent=51 // pred_check
          %p766 = pneg %p172
        $region54: #{tpu_custom_call.1} parent=51 // pred_check_branch
          %768 = sbr.rel (%p766) target = $region56
        $region55: #{tpu_custom_call.1} parent=51 // pred_region
          %s769 = sand.u32 %s157, 1
          %s770 = scalar_lea.sflag [#allocation4], %s769
          %s771 = sand.u32 %s157, 1
          %s772 = smul.addr %s771, 128
          %s773 = scalar_lea.vmem [#allocation5], %s772
          %774 = dma.done %s770, 2048
        $region56: #{tpu_custom_call.1} parent=51 // pred_fallthru
          _
      $region52: #{tpu_custom_call.1} parent=5 // pred_fallthru
        _
    $region6: #{tpu_custom_call.1} parent=1 // loop_footer
      %s21 = sadd.s32 1, %s17
    $region7: #{tpu_custom_call.1} parent=1 // loop_footer_branch
      %16 = sbr.rel target = $region3
    $region8: #{tpu_custom_call.1} parent=1 // loop_exit
      _
    %775 = vsyncpa [#allocation3], 1
    %s776 = scalar_lea.sflag [#allocation3], 1
    %777 = vsyncpa %s776, 1
    %778 = vsyncpa [#allocation4], 1
    %s779 = scalar_lea.sflag [#allocation4], 1
    %780 = vsyncpa %s779, 1

</llo_original>
